<compile_context>
chip_gen: v7x
topology: tpu7x:2x2x1
jax: 0.10.0
libtpu: 0.0.40
codegen_flags: <defaults>
</compile_context>

<pallas_src>
import jax
import jax.numpy as jnp
from jax.experimental import pallas as pl
from jax.experimental.pallas import tpu as pltpu

_MIB = 1024 * 1024


def _round_up(x, m):
    return ((x + m - 1) // m) * m


def _sublane(itemsize):
    # Native sublane-tile height by element width: f32 -> 8, bf16 -> 16, int8/fp8 -> 32.
    return {4: 8, 2: 16, 1: 32}.get(itemsize, 8)


def _x_tile_bytes(tile_b, n, tile_d, itemsize):
    # VMEM footprint of one [tile_b, n, tile_d] buffer incl. sublane/lane padding.
    return tile_b * _round_up(n, _sublane(itemsize)) * _round_up(tile_d, 128) * itemsize


def _out_tile_bytes(tile_b, tile_d, itemsize):
    return _round_up(tile_b, _sublane(itemsize)) * _round_up(tile_d, 128) * itemsize


def _chip_config():
    """Generation-dependent tile target / VMEM limit / minimum grid steps."""
    vmem = None
    try:
        info = pltpu.get_tpu_info()
        vmem = getattr(info, "vmem_capacity_bytes", None)
    except Exception:
        vmem = None
    if vmem is not None and vmem < 100 * _MIB:
        # v7x-like: 64 MiB VMEM per TensorCore, 2 TCs per chip sharing HBM.
        # Smaller tiles + >=4 steps so both cores get double-buffered work.
        return {"target_x_tile": 8 * _MIB, "vmem_limit": 40 * _MIB, "min_steps": 4}
    # v5e / v6e: 128 MiB physical VMEM, single TensorCore. Bigger tiles amortize
    # the ~0.35 us per-grid-step overhead to <3% of the HBM roofline.
    return {"target_x_tile": 14 * _MIB, "vmem_limit": 64 * _MIB, "min_steps": 2}


def _pick_tiles(B, n, D, itemsize, target_bytes, min_steps):
    """Choose (tile_b, tile_d) obeying the (8,128) layout rule and the VMEM budget."""
    b_align = _sublane(itemsize)

    # Batch tile base: dtype-aware sublane alignment of the output's first axis.
    if B % b_align == 0:
        tile_b = b_align
    elif B % 8 == 0:
        tile_b = 8
    else:
        tile_b = B  # fallback: full batch (block dim == full array dim is legal)

    # Feature tile (lane / HBM-contiguous axis): grow FIRST. Prefer full D so the
    # whole x slab is one contiguous DMA and the output store is lane-dense.
    if D % 128 == 0:
        if _x_tile_bytes(tile_b, n, D, itemsize) <= target_bytes:
            tile_d = D
        else:
            tile_d = 128
            while (tile_d * 2 <= D and D % (tile_d * 2) == 0
                   and _x_tile_bytes(tile_b, n, tile_d * 2, itemsize) <= target_bytes):
                tile_d *= 2
    else:
        tile_d = D  # not a multiple of 128: must take the full dim

    # Then grow the batch tile to fill the remaining budget.
    while (tile_b * 2 <= B and B % (tile_b * 2) == 0
           and _x_tile_bytes(tile_b * 2, n, tile_d, itemsize) <= target_bytes):
        tile_b *= 2

    # Guarantee enough grid steps for megacore sharding + pipeline overlap.
    def n_steps(tb, td):
        return -(-B // tb) * -(-D // td)

    while n_steps(tile_b, tile_d) < min_steps:
        if tile_b % (2 * b_align) == 0:
            tile_b //= 2            # keep D contiguous; stay sublane-aligned
        elif tile_d % 256 == 0 and D % (tile_d // 2) == 0:
            tile_d //= 2            # split D while keeping 128-lane alignment
        elif tile_b % 16 == 0:
            tile_b //= 2            # last resort: drop below native packed tile
        else:
            break                   # cannot split further; accept fewer steps

    return tile_b, tile_d


def _weight_class_kernel(w_ref, x_ref, o_ref):
    # w_ref: [n, 1] (full), x_ref: [tile_b, n, tile_d], o_ref: [tile_b, tile_d]
    w = w_ref[...].astype(jnp.float32)                     # [n, 1]
    # Exact softmax over dim 0 (tiny n): exp on EUP, reductions on XLU — fully
    # hidden under the multi-MiB x DMA at the chosen tile sizes.
    m = jnp.max(w, axis=0, keepdims=True)                  # [1, 1]
    e = jnp.exp(w - m)                                     # [n, 1]
    sm = e * pl.reciprocal(jnp.sum(e, axis=0, keepdims=True), approx=False)

    # Weighted reduction over n, accumulated in f32 on the VPU.
    x = x_ref[...].astype(jnp.float32)                     # [tile_b, n, tile_d]
    out = jnp.sum(x * sm[None, :, :], axis=1)              # [tile_b, tile_d]
    o_ref[...] = out.astype(o_ref.dtype)


def weight_class_forward(x, w, *, tile_b=None, tile_d=None):
    """x: [B, n, D], w: [n, 1] -> [B, D]  (== sum(x * softmax(w, 0), axis=1)).

    Output dtype matches x.dtype. Passing bf16 x halves the dominant HBM stream
    (kernel still accumulates in f32 internally).
    """
    B, n, D = x.shape
    assert w.shape == (n, 1)

    cfg = _chip_config()
    auto_b, auto_d = _pick_tiles(B, n, D, x.dtype.itemsize,
                                 cfg["target_x_tile"], cfg["min_steps"])
    tile_b = auto_b if tile_b is None else tile_b
    tile_d = auto_d if tile_d is None else tile_d

    grid = (-(-B // tile_b), -(-D // tile_d))

    # Double-buffered x + out plus the tiny w block, with headroom. Never ask for
    # less than the estimated footprint (covers ragged full-dim fallbacks).
    itemsize = x.dtype.itemsize
    est = (2 * _x_tile_bytes(tile_b, n, tile_d, itemsize)
           + 2 * _out_tile_bytes(tile_b, tile_d, itemsize)
           + 2 * _round_up(n, 8) * 128 * 4
           + 4 * _MIB)
    vmem_limit = max(cfg["vmem_limit"], est)

    return pl.pallas_call(
        _weight_class_kernel,
        out_shape=jax.ShapeDtypeStruct((B, D), x.dtype),
        grid_spec=pltpu.PrefetchScalarGridSpec(
            num_scalar_prefetch=0,
            grid=grid,
            in_specs=[
                # w is tiny: replicate the full [n, 1] block at every grid step.
                pl.BlockSpec((n, 1), lambda b, j: (0, 0)),
                # x tiled over batch (sublane) and feature (lane / contiguous) dims.
                pl.BlockSpec((tile_b, n, tile_d), lambda b, j: (b, 0, j)),
            ],
            out_specs=pl.BlockSpec((tile_b, tile_d), lambda b, j: (b, j)),
        ),
        compiler_params=pltpu.CompilerParams(
            dimension_semantics=("parallel", "parallel"),
            vmem_limit_bytes=vmem_limit,
        ),
    )(w, x)


if __name__ == "__main__":
    def _ref(x, w):
        sm = jax.nn.softmax(w.astype(jnp.float32), axis=0)              # [n, 1]
        out = jnp.sum(x.astype(jnp.float32) * sm[None, :, :], axis=1)   # [B, D]
        return out.astype(x.dtype)

    key = jax.random.PRNGKey(0)
    k1, k2, k3, k4, k5, k6 = jax.random.split(key, 6)

    # Case 1: sublane/lane-aligned shapes (B % 8 == 0, D % 128 == 0), f32.
    B, n, D = 8, 8, 1024
    x1 = jax.random.normal(k1, (B, n, D), dtype=jnp.float32)
    w1 = jax.random.normal(k2, (n, 1), dtype=jnp.float32)
    out1 = jax.block_until_ready(weight_class_forward(x1, w1))
    assert out1.shape == (B, D)
    assert jnp.allclose(out1, _ref(x1, w1), atol=1e-5, rtol=1e-5), "case 1 mismatch"

    # Case 2: ragged shapes exercising the full-dim fallbacks (B not % 8, small n).
    B2, n2, D2 = 4, 3, 384
    x2 = jax.random.normal(k3, (B2, n2, D2), dtype=jnp.float32)
    w2 = jax.random.normal(k4, (n2, 1), dtype=jnp.float32)
    out2 = jax.block_until_ready(weight_class_forward(x2, w2))
    assert out2.shape == (B2, D2)
    assert jnp.allclose(out2, _ref(x2, w2), atol=1e-5, rtol=1e-5), "case 2 mismatch"

    # Case 3: bf16 input (half the HBM bytes), f32 accumulation inside the kernel.
    B3, n3, D3 = 32, 4, 256
    x3 = jax.random.normal(k5, (B3, n3, D3), dtype=jnp.float32).astype(jnp.bfloat16)
    w3 = jax.random.normal(k6, (n3, 1), dtype=jnp.float32)
    out3 = jax.block_until_ready(weight_class_forward(x3, w3))
    assert out3.shape == (B3, D3)
    assert jnp.allclose(out3.astype(jnp.float32), _ref(x3, w3).astype(jnp.float32),
                        atol=2e-2, rtol=2e-2), "case 3 mismatch"

    print("KERNEL_OK")
</pallas_src>

<mosaic_0001>
module attributes {stable_mosaic.version = 11 : i64} {
  func.func @_weight_class_kernel(%arg0: i32, %arg1: i32, %arg2: memref<8x1xf32, #tpu.memory_space<vmem>>, %arg3: memref<8x8x512xf32, #tpu.memory_space<vmem>>, %arg4: memref<8x512xf32, #tpu.memory_space<vmem>>) attributes {dimension_semantics = [#tpu.dimension_semantics<parallel>, #tpu.dimension_semantics<parallel>], iteration_bounds = array<i64: 1, 2>, scalar_prefetch = 0 : i64, scratch_operands = 0 : i64, tpu.core_type = #tpu.core_type<tc>, window_params = [{pipeline_mode = #tpu.pipeline_mode<synchronous>, transform_indices = @transform_0, window_bounds = array<i64: 8, 1>}, {transform_indices = @transform_1, window_bounds = array<i64: 8, 8, 512>}, {transform_indices = @transform_2, window_bounds = array<i64: 8, 512>}]} {
    %c0 = arith.constant 0 : index
    %c0_0 = arith.constant 0 : index
    %0 = vector.load %arg2[%c0, %c0_0] : memref<8x1xf32, #tpu.memory_space<vmem>>, vector<8x1xf32>
    %cst = arith.constant dense<0xFF800000> : vector<1xf32>
    %1 = vector.multi_reduction <maximumf>, %0, %cst [0] : vector<8x1xf32> to vector<1xf32>
    %2 = vector.shape_cast %1 : vector<1xf32> to vector<1x1xf32>
    %3 = vector.broadcast %2 : vector<1x1xf32> to vector<8x1xf32>
    %4 = arith.subf %0, %3 : vector<8x1xf32>
    %5 = math.exp %4 : vector<8x1xf32>
    %cst_1 = arith.constant dense<0.000000e+00> : vector<1xf32>
    %6 = vector.multi_reduction <add>, %5, %cst_1 [0] : vector<8x1xf32> to vector<1xf32>
    %7 = vector.shape_cast %6 : vector<1xf32> to vector<1x1xf32>
    %8 = tpu.reciprocal %7 : vector<1x1xf32> -> vector<1x1xf32>
    %9 = vector.broadcast %8 : vector<1x1xf32> to vector<8x1xf32>
    %10 = arith.mulf %5, %9 : vector<8x1xf32>
    %c0_2 = arith.constant 0 : index
    %c0_3 = arith.constant 0 : index
    %c0_4 = arith.constant 0 : index
    %11 = vector.load %arg3[%c0_2, %c0_3, %c0_4] : memref<8x8x512xf32, #tpu.memory_space<vmem>>, vector<8x8x512xf32>
    %12 = vector.shape_cast %10 : vector<8x1xf32> to vector<1x8x1xf32>
    %13 = vector.broadcast %12 : vector<1x8x1xf32> to vector<8x8x512xf32>
    %14 = arith.mulf %11, %13 : vector<8x8x512xf32>
    %cst_5 = arith.constant dense<0.000000e+00> : vector<8x512xf32>
    %15 = vector.multi_reduction <add>, %14, %cst_5 [1] : vector<8x8x512xf32> to vector<8x512xf32>
    %c0_6 = arith.constant 0 : index
    %c0_7 = arith.constant 0 : index
    %16 = vector.load %arg4[%c0_6, %c0_7] : memref<8x512xf32, #tpu.memory_space<vmem>>, vector<8x512xf32>
    tpu.vector_store %arg4[%c0_6, %c0_7], %15 {strides = array<i32>} : memref<8x512xf32, #tpu.memory_space<vmem>>, vector<8x512xf32>,
    return
  }
  func.func @transform_0(%arg0: i32, %arg1: i32) -> (i32, i32) {
    %c0_i32 = arith.constant 0 : i32
    %c0_i32_0 = arith.constant 0 : i32
    %c0_i32_1 = arith.constant 0 : i32
    return %c0_i32, %c0_i32_0 : i32, i32
  }
  func.func @transform_1(%arg0: i32, %arg1: i32) -> (i32, i32, i32) {
    %c0_i32 = arith.constant 0 : i32
    %c0_i32_0 = arith.constant 0 : i32
    return %arg0, %c0_i32, %arg1 : i32, i32, i32
  }
  func.func @transform_2(%arg0: i32, %arg1: i32) -> (i32, i32) {
    %c0_i32 = arith.constant 0 : i32
    return %arg0, %arg1 : i32, i32
  }
}

</mosaic_0001>

<llo_original>
// kernel: tpu_custom_call.1
$region0: #{tpu_custom_call.1}
  #allocation0 [shape = 'u32[]', space=smem, size = 0x4, offset = 0x4, fixed_abs, tag = 'smem constant byte address 0x4 - core index']
  #allocation1 [shape = 'u32[144,128]{1,0:T(1,128)}', space=vmem, size = 0x12000, scoped, tag = 'internal scratch']
  %s0 = inlined_call_operand.hbm [shape: f32[8,1], index: 0, kind: input, shape index: {}]
  %s1 = inlined_call_operand.hbm [shape: f32[8,8,1024], index: 1, kind: input, shape index: {}]
  %s2 = inlined_call_operand.hbm [shape: f32[8,1024], index: 2, kind: output, shape index: {}]
  %s3 = sld [smem:[#allocation0]]
  $region49: #{tpu_custom_call.1} parent=0
    _
  %s5 = ssub.s32 1, %s3
  %s6 = scalar_select 0, %s5, %s3
  $region1: #{tpu_custom_call.1} parent=0
    #allocation2 [shape = 'u8[4096]{0}', space=vmem, size = 0x1000, scoped, tag = 'input window, operand 0, single buffered']
    #allocation3 [shape = 's32[2]{0}', space=sflag, size = 0x8, scoped, tag = 'scoped memory for tpu_custom_call.1']
    #allocation4 [shape = 's32[2]{0}', space=sflag, size = 0x8, scoped, tag = 'scoped memory for tpu_custom_call.1']
    #allocation5 [shape = 'u8[262144]{0}', space=vmem, size = 0x40000, scoped, tag = 'input window, operand 1']
    #allocation6 [shape = 's32[2]{0}', space=sflag, size = 0x8, scoped, tag = 'scoped memory for tpu_custom_call.1']
    #allocation7 [shape = 'u8[32768]{0}', space=vmem, size = 0x8000, scoped, tag = 'output window, operand 0']
    %7 = vsyncpa [#allocation3], 0
    %8 = vsyncpa [#allocation6], 0
    %s9 = scalar_lea.sflag [#allocation6], 1
    %10 = vsyncpa %s9, 0
    %11 = vsyncpa [#allocation4], 0
    %s12 = scalar_lea.sflag [#allocation4], 1
    %13 = vsyncpa %s12, 0
    loop: start=0, step=1, limit=4
    $region2: #{tpu_custom_call.1} parent=1 // loop_pre_header
      _
    $region3: #{tpu_custom_call.1} parent=1 // loop_header
      %s15 = sphi 0, %s19
      %p16 = scmp.ge.s32.totalorder %s15, 4
      %s22 = sphi 0, %s34
      %s23 = sphi 0, %s30
      %s24 = sphi 0, %s22
      %s25 = sphi 0, %s23
      %s26 = sphi 0, %s24
      %s27 = sphi 0, %s25
      %s35 = sphi 0, %s35
      %s37 = sphi 0, %s35
      %s38 = sphi 0, %s37
      %s52 = sphi 0, %s38
      %s60 = sphi 0, %s62
      %s63 = sphi 0, %s60
      %s64 = sphi 0, %s63
      %s80 = sphi 0, %s64
      %s88 = sphi 0, %s90
      %s91 = sphi 0, %s88
      %s92 = sphi 0, %s91
      %s108 = sphi 0, %s92
    $region4: #{tpu_custom_call.1} parent=1 // loop_header_branch
      %18 = sbr.rel (%p16) target = $region8
    $region5: #{tpu_custom_call.1} parent=1 // loop_body
      %s20 = ssub.s32 %s15, 1
      %s21 = ssub.s32 %s15, 2
      %s28 = sadd.s32 1, %s23
      %p29 = scmp.ge.s32.totalorder %s28, 2
      %s30 = scalar_select %p29, 0, %s28
      %s31 = sadd.s32 1, %s22
      %s32 = scalar_select %p29, %s31, %s22
      %p33 = scmp.ge.s32.totalorder %s32, 1
      %s34 = scalar_select %p33, 0, %s32
      %s36 = sadd.s32 %s35, 1
      %p39 = scmp.eq.s32.totalorder %s15, 1
      %p40 = scmp.ne.s32.totalorder %s35, %s37
      %p41 = scmp.eq.s32.totalorder %s15, 0
      %p42 = por %p40, %p41
      %p43 = scmp.ne.s32.totalorder %s35, %s37
      %p44 = scmp.eq.s32.totalorder %s20, 1
      %p45 = por %p43, %p44
      %p46 = scmp.ne.s32.totalorder %s37, %s38
      %p47 = scmp.eq.s32.totalorder %s20, 0
      %p48 = por %p46, %p47
      %p49 = scmp.ne.s32.totalorder %s37, %s38
      %p50 = scmp.eq.s32.totalorder %s21, 1
      %p51 = por %p49, %p50
      %p53 = scmp.ne.s32.totalorder %s38, %s52
      %p54 = scmp.eq.s32.totalorder %s21, 0
      %p55 = por %p53, %p54
      %s56 = ssub.s32 %s22, %s34
      %s57 = ssub.s32 %s23, %s30
      %s58 = sor.u32 %s56, %s57
      %p59 = scmp.eq.s32.totalorder %s58, 0
      %s61 = sadd.s32 %s60, 1
      %s62 = scalar_select %p59, %s60, %s61
      %p65 = pneg %p59
      %p66 = scmp.eq.s32.totalorder %s15, 1
      %p67 = por %p65, %p66
      %p68 = scmp.ne.s32.totalorder %s60, %s63
      %p69 = scmp.eq.s32.totalorder %s15, 0
      %p70 = por %p68, %p69
      %p71 = scmp.ne.s32.totalorder %s60, %s63
      %p72 = scmp.eq.s32.totalorder %s20, 1
      %p73 = por %p71, %p72
      %p74 = scmp.ne.s32.totalorder %s63, %s64
      %p75 = scmp.eq.s32.totalorder %s20, 0
      %p76 = por %p74, %p75
      %p77 = scmp.ne.s32.totalorder %s63, %s64
      %p78 = scmp.eq.s32.totalorder %s21, 1
      %p79 = por %p77, %p78
      %p81 = scmp.ne.s32.totalorder %s64, %s80
      %p82 = scmp.eq.s32.totalorder %s21, 0
      %p83 = por %p81, %p82
      %s84 = ssub.s32 %s22, %s34
      %s85 = ssub.s32 %s23, %s30
      %s86 = sor.u32 %s84, %s85
      %p87 = scmp.eq.s32.totalorder %s86, 0
      %s89 = sadd.s32 %s88, 1
      %s90 = scalar_select %p87, %s88, %s89
      %p93 = pneg %p87
      %p94 = scmp.eq.s32.totalorder %s15, 1
      %p95 = por %p93, %p94
      %p96 = scmp.ne.s32.totalorder %s88, %s91
      %p97 = scmp.eq.s32.totalorder %s15, 0
      %p98 = por %p96, %p97
      %p99 = scmp.ne.s32.totalorder %s88, %s91
      %p100 = scmp.eq.s32.totalorder %s20, 1
      %p101 = por %p99, %p100
      %p102 = scmp.ne.s32.totalorder %s91, %s92
      %p103 = scmp.eq.s32.totalorder %s20, 0
      %p104 = por %p102, %p103
      %p105 = scmp.ne.s32.totalorder %s91, %s92
      %p106 = scmp.eq.s32.totalorder %s21, 1
      %p107 = por %p105, %p106
      %p109 = scmp.ne.s32.totalorder %s92, %s108
      %p110 = scmp.eq.s32.totalorder %s21, 0
      %p111 = por %p109, %p110
      %p112 = scmp.le.s32.totalorder 1, %s15
      %p113 = scmp.lt.s32.totalorder %s15, 3
      %p114 = pnand %p112, %p113
      %p115 = pneg %p114
      // Predicated region
      $region9: #{tpu_custom_call.1} parent=5 // pred_check
        _
      $region10: #{tpu_custom_call.1} parent=5 // pred_check_branch
        %117 = sbr.rel (%p114) target = $region12
      $region11: #{tpu_custom_call.1} parent=5 // pred_region
        %s118 = ssub.s32 %s15, 1
        // Predicated region
        $region13: #{tpu_custom_call.1} parent=11 // pred_check
          %p119 = pneg %p48
        $region14: #{tpu_custom_call.1} parent=11 // pred_check_branch
          %121 = sbr.rel (%p119) target = $region16
        $region15: #{tpu_custom_call.1} parent=11 // pred_region
          %s123 = ssub.s32 128, 128
          %124 = vsyncadd [#allocation3], %s123
          %s126 = sshll.u32 [#allocation2], 4
          %s127 = int_to_ptr.vmem [resolvable:$true] %s126
          %129 = dma.hbm_to_vmem [thread:$0]  %s0, 128, %s127, [#allocation3]
        $region16: #{tpu_custom_call.1} parent=11 // pred_fallthru
          _
      $region12: #{tpu_custom_call.1} parent=5 // pred_fallthru
        _
      %p130 = scmp.lt.s32.totalorder %s15, 2
      // Predicated region
      $region17: #{tpu_custom_call.1} parent=5 // pred_check
        %p131 = pneg %p130
      $region18: #{tpu_custom_call.1} parent=5 // pred_check_branch
        %133 = sbr.rel (%p131) target = $region20
      $region19: #{tpu_custom_call.1} parent=5 // pred_region
        // Predicated region
        $region21: #{tpu_custom_call.1} parent=19 // pred_check
          %p134 = pneg %p70
        $region22: #{tpu_custom_call.1} parent=19 // pred_check_branch
          %136 = sbr.rel (%p134) target = $region24
        $region23: #{tpu_custom_call.1} parent=19 // pred_region
          %s137 = sand.u32 %s60, 1
          %s138 = scalar_lea.sflag [#allocation6], %s137
          %s139 = sand.u32 %s60, 1
          %s140 = smul.addr %s139, 256
          %s141 = scalar_lea.vmem [#allocation5], %s140
          %s142 = smul.u32 8, %s22
          %s143 = smul.u32 4, %s23
          %s145 = ssub.s32 4096, 4096
          %146 = vsyncadd %s138, %s145
          %s147 = smul.addr %s142, 8
          %s148 = sadd.s32 %s143, %s147
          %s149 = smul.addr %s148, 128
          %s150 = scalar_lea.hbm %s1, %s149
          %s151 = sshll.u32 %s141, 4
          %s152 = int_to_ptr.vmem [resolvable:$true] %s151
          %157 = dma.hbm_to_vmem [thread:$0]  %s150, 4096, %s152, %s138, 1024, 512, 32
        $region24: #{tpu_custom_call.1} parent=19 // pred_fallthru
          _
      $region20: #{tpu_custom_call.1} parent=5 // pred_fallthru
        _
      %p158 = scmp.le.s32.totalorder 1, %s15
      %p159 = scmp.lt.s32.totalorder %s15, 3
      %p160 = pnand %p158, %p159
      %p161 = pneg %p160
      // Predicated region
      $region25: #{tpu_custom_call.1} parent=5 // pred_check
        _
      $region26: #{tpu_custom_call.1} parent=5 // pred_check_branch
        %163 = sbr.rel (%p160) target = $region28
      $region27: #{tpu_custom_call.1} parent=5 // pred_region
        %s164 = ssub.s32 %s15, 1
        // Predicated region
        $region29: #{tpu_custom_call.1} parent=27 // pred_check
          %p165 = pneg %p48
        $region30: #{tpu_custom_call.1} parent=27 // pred_check_branch
          %167 = sbr.rel (%p165) target = $region32
        $region31: #{tpu_custom_call.1} parent=27 // pred_region
          %168 = dma.done [#allocation3], 128
        $region32: #{tpu_custom_call.1} parent=27 // pred_fallthru
          _
        %s169 = sand.u32 %s63, 1
        %s170 = scalar_lea.sflag [#allocation6], %s169
        %s171 = sand.u32 %s63, 1
        %s172 = smul.addr %s171, 256
        %s173 = scalar_lea.vmem [#allocation5], %s172
        // Predicated region
        $region33: #{tpu_custom_call.1} parent=27 // pred_check
          %p174 = pneg %p76
        $region34: #{tpu_custom_call.1} parent=27 // pred_check_branch
          %176 = sbr.rel (%p174) target = $region36
        $region35: #{tpu_custom_call.1} parent=27 // pred_region
          %177 = dma.done %s170, 4096
        $region36: #{tpu_custom_call.1} parent=27 // pred_fallthru
          _
        %p178 = pneg %p48
        %p179 = pneg %p45
        %s180 = sand.u32 %s63, 1
        %s181 = scalar_lea.sflag [#allocation6], %s180
        %s182 = sand.u32 %s63, 1
        %s183 = smul.addr %s182, 256
        %s184 = scalar_lea.vmem [#allocation5], %s183
        %p185 = pneg %p76
        %p186 = pneg %p73
        %p187 = pneg %p104
        %p188 = pneg %p101
        %s189 = sand.u32 %s91, 1
        %s190 = scalar_lea.sflag [#allocation4], %s189
        %s191 = sand.u32 %s91, 1
        %s192 = smul.addr %s191, 32
        %s193 = scalar_lea.vmem [#allocation7], %s192
        %s194 = smul.u32 8, %s24
        %s195 = smul.u32 4, %s25
        %s196 = smul.u32 4, %s25
        %v197 = vld [vmem:[#allocation2] sm:$0xff]
        %vm198 = vcmask 7168
        %v199 = vsel %vm198, %v197, -inf
        %v200 = vrot.slane %v199, 4
        %v201 = vmax.f32 %v199, %v200
        %v202 = vrot.slane %v201, 2
        %v203 = vmax.f32 %v201, %v202
        %v204 = vrot.slane %v203, 1
        %v205 = vmax.f32 %v203, %v204
        %v206 = vsub.f32 %v197, %v205
        %v207 = vmul.f32 %v206, 1.442695
        %v208 = vpow.pop %v207
        %v209 = vsel %vm198, %v208, 0.0
        %v210 = vrot.slane %v209, 4
        %v211 = vadd.f32 %v209, %v210
        %v212 = vrot.slane %v211, 2
        %v213 = vadd.f32 %v211, %v212
        %v214 = vrot.slane %v213, 1
        %v215 = vadd.f32 %v213, %v214
        %v216 = vrcp.pop %v215
        %v217 = vmul.f32 %v208, %v216
        %v218 = vld [vmem:[%s173] sm:$0xff]
        %v219 = vld [vmem:[%s173 + $0x8] sm:$0xff]
        %v220 = vld [vmem:[%s173 + $0x10] sm:$0xff]
        %v221 = vld [vmem:[%s173 + $0x18] sm:$0xff]
        %v222 = vld [vmem:[%s173 + $0x20] sm:$0xff]
        %v223 = vld [vmem:[%s173 + $0x28] sm:$0xff]
        %v224 = vld [vmem:[%s173 + $0x30] sm:$0xff]
        %v225 = vld [vmem:[%s173 + $0x38] sm:$0xff]
        %v226 = vld [vmem:[%s173 + $0x40] sm:$0xff]
        %v227 = vld [vmem:[%s173 + $0x48] sm:$0xff]
        %v228 = vld [vmem:[%s173 + $0x50] sm:$0xff]
        %v229 = vld [vmem:[%s173 + $0x58] sm:$0xff]
        %v230 = vld [vmem:[%s173 + $0x60] sm:$0xff]
        %v231 = vld [vmem:[%s173 + $0x68] sm:$0xff]
        %v232 = vld [vmem:[%s173 + $0x70] sm:$0xff]
        %v233 = vld [vmem:[%s173 + $0x78] sm:$0xff]
        %v234 = vld [vmem:[%s173 + $0x80] sm:$0xff]
        %v235 = vld [vmem:[%s173 + $0x88] sm:$0xff]
        %v236 = vld [vmem:[%s173 + $0x90] sm:$0xff]
        %v237 = vld [vmem:[%s173 + $0x98] sm:$0xff]
        %v238 = vld [vmem:[%s173 + $0xa0] sm:$0xff]
        %v239 = vld [vmem:[%s173 + $0xa8] sm:$0xff]
        %v240 = vld [vmem:[%s173 + $0xb0] sm:$0xff]
        %v241 = vld [vmem:[%s173 + $0xb8] sm:$0xff]
        %v242 = vld [vmem:[%s173 + $0xc0] sm:$0xff]
        %v243 = vld [vmem:[%s173 + $0xc8] sm:$0xff]
        %v244 = vld [vmem:[%s173 + $0xd0] sm:$0xff]
        %v245 = vld [vmem:[%s173 + $0xd8] sm:$0xff]
        %v246 = vld [vmem:[%s173 + $0xe0] sm:$0xff]
        %v247 = vld [vmem:[%s173 + $0xe8] sm:$0xff]
        %v248 = vld [vmem:[%s173 + $0xf0] sm:$0xff]
        %v249 = vld [vmem:[%s173 + $0xf8] sm:$0xff]
        %251 = vset.pattern.permute.xlu0 0
        %252 = vperm.xlu0 %251, %v217
        %v253 = vpop.permute.xlu0 %252
        %v255 = vmul.f32 %v218, %v253
        %v256 = vmul.f32 %v219, %v253
        %v257 = vmul.f32 %v220, %v253
        %v258 = vmul.f32 %v221, %v253
        %v259 = vmul.f32 %v222, %v253
        %v260 = vmul.f32 %v223, %v253
        %v261 = vmul.f32 %v224, %v253
        %v262 = vmul.f32 %v225, %v253
        %v263 = vmul.f32 %v226, %v253
        %v264 = vmul.f32 %v227, %v253
        %v265 = vmul.f32 %v228, %v253
        %v266 = vmul.f32 %v229, %v253
        %v267 = vmul.f32 %v230, %v253
        %v268 = vmul.f32 %v231, %v253
        %v269 = vmul.f32 %v232, %v253
        %v270 = vmul.f32 %v233, %v253
        %v271 = vmul.f32 %v234, %v253
        %v272 = vmul.f32 %v235, %v253
        %v273 = vmul.f32 %v236, %v253
        %v274 = vmul.f32 %v237, %v253
        %v275 = vmul.f32 %v238, %v253
        %v276 = vmul.f32 %v239, %v253
        %v277 = vmul.f32 %v240, %v253
        %v278 = vmul.f32 %v241, %v253
        %v279 = vmul.f32 %v242, %v253
        %v280 = vmul.f32 %v243, %v253
        %v281 = vmul.f32 %v244, %v253
        %v282 = vmul.f32 %v245, %v253
        %v283 = vmul.f32 %v246, %v253
        %v284 = vmul.f32 %v247, %v253
        %v285 = vmul.f32 %v248, %v253
        %v286 = vmul.f32 %v249, %v253
        %v287 = vrot.slane %v255, 4
        %v288 = vadd.f32 %v255, %v287
        %v289 = vrot.slane %v288, 2
        %v290 = vadd.f32 %v288, %v289
        %v291 = vrot.slane %v290, 1
        %v292 = vadd.f32 %v290, %v291
        %v293 = vrot.slane %v256, 4
        %v294 = vadd.f32 %v256, %v293
        %v295 = vrot.slane %v294, 2
        %v296 = vadd.f32 %v294, %v295
        %v297 = vrot.slane %v296, 1
        %v298 = vadd.f32 %v296, %v297
        %v299 = vrot.slane %v257, 4
        %v300 = vadd.f32 %v257, %v299
        %v301 = vrot.slane %v300, 2
        %v302 = vadd.f32 %v300, %v301
        %v303 = vrot.slane %v302, 1
        %v304 = vadd.f32 %v302, %v303
        %v305 = vrot.slane %v258, 4
        %v306 = vadd.f32 %v258, %v305
        %v307 = vrot.slane %v306, 2
        %v308 = vadd.f32 %v306, %v307
        %v309 = vrot.slane %v308, 1
        %v310 = vadd.f32 %v308, %v309
        %v311 = vrot.slane %v259, 4
        %v312 = vadd.f32 %v259, %v311
        %v313 = vrot.slane %v312, 2
        %v314 = vadd.f32 %v312, %v313
        %v315 = vrot.slane %v314, 1
        %v316 = vadd.f32 %v314, %v315
        %v317 = vrot.slane %v260, 4
        %v318 = vadd.f32 %v260, %v317
        %v319 = vrot.slane %v318, 2
        %v320 = vadd.f32 %v318, %v319
        %v321 = vrot.slane %v320, 1
        %v322 = vadd.f32 %v320, %v321
        %v323 = vrot.slane %v261, 4
        %v324 = vadd.f32 %v261, %v323
        %v325 = vrot.slane %v324, 2
        %v326 = vadd.f32 %v324, %v325
        %v327 = vrot.slane %v326, 1
        %v328 = vadd.f32 %v326, %v327
        %v329 = vrot.slane %v262, 4
        %v330 = vadd.f32 %v262, %v329
        %v331 = vrot.slane %v330, 2
        %v332 = vadd.f32 %v330, %v331
        %v333 = vrot.slane %v332, 1
        %v334 = vadd.f32 %v332, %v333
        %v335 = vrot.slane %v263, 4
        %v336 = vadd.f32 %v263, %v335
        %v337 = vrot.slane %v336, 2
        %v338 = vadd.f32 %v336, %v337
        %v339 = vrot.slane %v338, 1
        %v340 = vadd.f32 %v338, %v339
        %v341 = vrot.slane %v264, 4
        %v342 = vadd.f32 %v264, %v341
        %v343 = vrot.slane %v342, 2
        %v344 = vadd.f32 %v342, %v343
        %v345 = vrot.slane %v344, 1
        %v346 = vadd.f32 %v344, %v345
        %v347 = vrot.slane %v265, 4
        %v348 = vadd.f32 %v265, %v347
        %v349 = vrot.slane %v348, 2
        %v350 = vadd.f32 %v348, %v349
        %v351 = vrot.slane %v350, 1
        %v352 = vadd.f32 %v350, %v351
        %v353 = vrot.slane %v266, 4
        %v354 = vadd.f32 %v266, %v353
        %v355 = vrot.slane %v354, 2
        %v356 = vadd.f32 %v354, %v355
        %v357 = vrot.slane %v356, 1
        %v358 = vadd.f32 %v356, %v357
        %v359 = vrot.slane %v267, 4
        %v360 = vadd.f32 %v267, %v359
        %v361 = vrot.slane %v360, 2
        %v362 = vadd.f32 %v360, %v361
        %v363 = vrot.slane %v362, 1
        %v364 = vadd.f32 %v362, %v363
        %v365 = vrot.slane %v268, 4
        %v366 = vadd.f32 %v268, %v365
        %v367 = vrot.slane %v366, 2
        %v368 = vadd.f32 %v366, %v367
        %v369 = vrot.slane %v368, 1
        %v370 = vadd.f32 %v368, %v369
        %v371 = vrot.slane %v269, 4
        %v372 = vadd.f32 %v269, %v371
        %v373 = vrot.slane %v372, 2
        %v374 = vadd.f32 %v372, %v373
        %v375 = vrot.slane %v374, 1
        %v376 = vadd.f32 %v374, %v375
        %v377 = vrot.slane %v270, 4
        %v378 = vadd.f32 %v270, %v377
        %v379 = vrot.slane %v378, 2
        %v380 = vadd.f32 %v378, %v379
        %v381 = vrot.slane %v380, 1
        %v382 = vadd.f32 %v380, %v381
        %v383 = vrot.slane %v271, 4
        %v384 = vadd.f32 %v271, %v383
        %v385 = vrot.slane %v384, 2
        %v386 = vadd.f32 %v384, %v385
        %v387 = vrot.slane %v386, 1
        %v388 = vadd.f32 %v386, %v387
        %v389 = vrot.slane %v272, 4
        %v390 = vadd.f32 %v272, %v389
        %v391 = vrot.slane %v390, 2
        %v392 = vadd.f32 %v390, %v391
        %v393 = vrot.slane %v392, 1
        %v394 = vadd.f32 %v392, %v393
        %v395 = vrot.slane %v273, 4
        %v396 = vadd.f32 %v273, %v395
        %v397 = vrot.slane %v396, 2
        %v398 = vadd.f32 %v396, %v397
        %v399 = vrot.slane %v398, 1
        %v400 = vadd.f32 %v398, %v399
        %v401 = vrot.slane %v274, 4
        %v402 = vadd.f32 %v274, %v401
        %v403 = vrot.slane %v402, 2
        %v404 = vadd.f32 %v402, %v403
        %v405 = vrot.slane %v404, 1
        %v406 = vadd.f32 %v404, %v405
        %v407 = vrot.slane %v275, 4
        %v408 = vadd.f32 %v275, %v407
        %v409 = vrot.slane %v408, 2
        %v410 = vadd.f32 %v408, %v409
        %v411 = vrot.slane %v410, 1
        %v412 = vadd.f32 %v410, %v411
        %v413 = vrot.slane %v276, 4
        %v414 = vadd.f32 %v276, %v413
        %v415 = vrot.slane %v414, 2
        %v416 = vadd.f32 %v414, %v415
        %v417 = vrot.slane %v416, 1
        %v418 = vadd.f32 %v416, %v417
        %v419 = vrot.slane %v277, 4
        %v420 = vadd.f32 %v277, %v419
        %v421 = vrot.slane %v420, 2
        %v422 = vadd.f32 %v420, %v421
        %v423 = vrot.slane %v422, 1
        %v424 = vadd.f32 %v422, %v423
        %v425 = vrot.slane %v278, 4
        %v426 = vadd.f32 %v278, %v425
        %v427 = vrot.slane %v426, 2
        %v428 = vadd.f32 %v426, %v427
        %v429 = vrot.slane %v428, 1
        %v430 = vadd.f32 %v428, %v429
        %v431 = vrot.slane %v279, 4
        %v432 = vadd.f32 %v279, %v431
        %v433 = vrot.slane %v432, 2
        %v434 = vadd.f32 %v432, %v433
        %v435 = vrot.slane %v434, 1
        %v436 = vadd.f32 %v434, %v435
        %v437 = vrot.slane %v280, 4
        %v438 = vadd.f32 %v280, %v437
        %v439 = vrot.slane %v438, 2
        %v440 = vadd.f32 %v438, %v439
        %v441 = vrot.slane %v440, 1
        %v442 = vadd.f32 %v440, %v441
        %v443 = vrot.slane %v281, 4
        %v444 = vadd.f32 %v281, %v443
        %v445 = vrot.slane %v444, 2
        %v446 = vadd.f32 %v444, %v445
        %v447 = vrot.slane %v446, 1
        %v448 = vadd.f32 %v446, %v447
        %v449 = vrot.slane %v282, 4
        %v450 = vadd.f32 %v282, %v449
        %v451 = vrot.slane %v450, 2
        %v452 = vadd.f32 %v450, %v451
        %v453 = vrot.slane %v452, 1
        %v454 = vadd.f32 %v452, %v453
        %v455 = vrot.slane %v283, 4
        %v456 = vadd.f32 %v283, %v455
        %v457 = vrot.slane %v456, 2
        %v458 = vadd.f32 %v456, %v457
        %v459 = vrot.slane %v458, 1
        %v460 = vadd.f32 %v458, %v459
        %v461 = vrot.slane %v284, 4
        %v462 = vadd.f32 %v284, %v461
        %v463 = vrot.slane %v462, 2
        %v464 = vadd.f32 %v462, %v463
        %v465 = vrot.slane %v464, 1
        %v466 = vadd.f32 %v464, %v465
        %v467 = vrot.slane %v285, 4
        %v468 = vadd.f32 %v285, %v467
        %v469 = vrot.slane %v468, 2
        %v470 = vadd.f32 %v468, %v469
        %v471 = vrot.slane %v470, 1
        %v472 = vadd.f32 %v470, %v471
        %v473 = vrot.slane %v286, 4
        %v474 = vadd.f32 %v286, %v473
        %v475 = vrot.slane %v474, 2
        %v476 = vadd.f32 %v474, %v475
        %v477 = vrot.slane %v476, 1
        %v478 = vadd.f32 %v476, %v477
        %vm511 = vcmask 1041409
        %v512 = vsel %vm511, %v316, %v292
        %vm513 = vcmask 1042434
        %v514 = vsel %vm513, %v340, %v512
        %vm515 = vcmask 1043459
        %v516 = vsel %vm515, %v364, %v514
        %vm517 = vcmask 1044484
        %v518 = vsel %vm517, %v388, %v516
        %vm519 = vcmask 1045509
        %v520 = vsel %vm519, %v412, %v518
        %vm521 = vcmask 1046534
        %v522 = vsel %vm521, %v436, %v520
        %vm523 = vcmask 1047559
        %v524 = vsel %vm523, %v460, %v522
        %v525 = vsel %vm511, %v322, %v298
        %v526 = vsel %vm513, %v346, %v525
        %v527 = vsel %vm515, %v370, %v526
        %v528 = vsel %vm517, %v394, %v527
        %v529 = vsel %vm519, %v418, %v528
        %v530 = vsel %vm521, %v442, %v529
        %v531 = vsel %vm523, %v466, %v530
        %v532 = vsel %vm511, %v328, %v304
        %v533 = vsel %vm513, %v352, %v532
        %v534 = vsel %vm515, %v376, %v533
        %v535 = vsel %vm517, %v400, %v534
        %v536 = vsel %vm519, %v424, %v535
        %v537 = vsel %vm521, %v448, %v536
        %v538 = vsel %vm523, %v472, %v537
        %v539 = vsel %vm511, %v334, %v310
        %v540 = vsel %vm513, %v358, %v539
        %v541 = vsel %vm515, %v382, %v540
        %v542 = vsel %vm517, %v406, %v541
        %v543 = vsel %vm519, %v430, %v542
        %v544 = vsel %vm521, %v454, %v543
        %v545 = vsel %vm523, %v478, %v544
        %550 = vst [vmem:[%s193] sm:$0xff] %v524
        %551 = vst [vmem:[%s193 + $0x8] sm:$0xff] %v531
        %552 = vst [vmem:[%s193 + $0x10] sm:$0xff] %v538
        %553 = vst [vmem:[%s193 + $0x18] sm:$0xff] %v545
        %s554 = sand.u32 %s91, 1
        %s555 = scalar_lea.sflag [#allocation4], %s554
        %s556 = sand.u32 %s91, 1
        %s557 = smul.addr %s556, 32
        %s558 = scalar_lea.vmem [#allocation7], %s557
        // Predicated region
        $region37: #{tpu_custom_call.1} parent=27 // pred_check
          %p559 = pneg %p101
        $region38: #{tpu_custom_call.1} parent=27 // pred_check_branch
          %561 = sbr.rel (%p559) target = $region40
        $region39: #{tpu_custom_call.1} parent=27 // pred_region
          %s562 = smul.u32 4, %s25
          %s564 = ssub.s32 512, 512
          %565 = vsyncadd %s555, %s564
          %s566 = smul.addr %s24, 8
          %s567 = sadd.s32 %s562, %s566
          %s568 = smul.addr %s567, 128
          %s569 = scalar_lea.hbm %s2, %s568
          %s571 = sshll.u32 %s558, 4
          %s572 = int_to_ptr.vmem [resolvable:$true] %s571
          %574 = dma.vmem_to_hbm [thread:$0]  %s572, 512, %s569, %s555
        $region40: #{tpu_custom_call.1} parent=27 // pred_fallthru
          _
      $region28: #{tpu_custom_call.1} parent=5 // pred_fallthru
        _
      %p575 = scmp.le.s32.totalorder 2, %s15
      // Predicated region
      $region41: #{tpu_custom_call.1} parent=5 // pred_check
        %p576 = pneg %p575
      $region42: #{tpu_custom_call.1} parent=5 // pred_check_branch
        %578 = sbr.rel (%p576) target = $region44
      $region43: #{tpu_custom_call.1} parent=5 // pred_region
        %s579 = ssub.s32 %s15, 2
        // Predicated region
        $region45: #{tpu_custom_call.1} parent=43 // pred_check
          %p580 = pneg %p107
        $region46: #{tpu_custom_call.1} parent=43 // pred_check_branch
          %582 = sbr.rel (%p580) target = $region48
        $region47: #{tpu_custom_call.1} parent=43 // pred_region
          %s583 = sand.u32 %s92, 1
          %s584 = scalar_lea.sflag [#allocation4], %s583
          %s585 = sand.u32 %s92, 1
          %s586 = smul.addr %s585, 32
          %s587 = scalar_lea.vmem [#allocation7], %s586
          %588 = dma.done %s584, 512
        $region48: #{tpu_custom_call.1} parent=43 // pred_fallthru
          _
      $region44: #{tpu_custom_call.1} parent=5 // pred_fallthru
        _
    $region6: #{tpu_custom_call.1} parent=1 // loop_footer
      %s19 = sadd.s32 1, %s15
    $region7: #{tpu_custom_call.1} parent=1 // loop_footer_branch
      %14 = sbr.rel target = $region3
    $region8: #{tpu_custom_call.1} parent=1 // loop_exit
      _
    %589 = vsyncpa [#allocation3], 1
    %s590 = scalar_lea.sflag [#allocation3], 1
    %591 = vsyncpa %s590, 1
    %592 = vsyncpa [#allocation6], 1
    %s593 = scalar_lea.sflag [#allocation6], 1
    %594 = vsyncpa %s593, 1
    %595 = vsyncpa [#allocation4], 1
    %s596 = scalar_lea.sflag [#allocation4], 1
    %597 = vsyncpa %s596, 1

</llo_original>
